<compile_context>
chip_gen: v5e
topology: v5e:2x2
jax: 0.10.0
libtpu: 0.0.40
codegen_flags: <defaults>
</compile_context>

<pallas_src>
import jax
import jax.numpy as jnp
from jax.experimental import pallas as pl
from jax.experimental.pallas import tpu as pltpu


def _round_up(x, m):
    return ((x + m - 1) // m) * m


def _vmem_limit_bytes():
    """~3/4 of physical VMEM, capped at 96 MiB (safe on v5e/v6e/v7x)."""
    try:
        cap = pltpu.get_tpu_info().vmem_capacity_bytes
    except Exception:
        cap = 64 * 1024 * 1024
    return min((int(cap) * 3) // 4, 96 * 1024 * 1024)


# --------------------------------------------------------------------------
# Kernel 1: one GRU step, fully resident in VMEM (tiny working set).
#   * fused gate weights, each gate block padded to Hp = round_up(H, 128)
#     so the r/z/n slices are lane-aligned full blocks.
#   * bf16 MXU operands, f32 accumulation, f32 elementwise gate math.
#   * also emits the bf16 projection activation [x, h_new] = [emb, ctx, h_new]
#     so the projection kernel never re-casts or re-concatenates per tile.
# --------------------------------------------------------------------------
def gru_step_kernel(x_ref, h_ref, wi_ref, wh_ref, bi_ref, bh_ref,
                    hnew_ref, act_ref):
    x = x_ref[...]                                    # (Bp, E+H) f32
    h = h_ref[...]                                    # (Bp, H)   f32
    H = h.shape[-1]

    gi = jnp.dot(x.astype(jnp.bfloat16), wi_ref[...],
                 preferred_element_type=jnp.float32) + bi_ref[...]
    gh = jnp.dot(h.astype(jnp.bfloat16), wh_ref[...],
                 preferred_element_type=jnp.float32) + bh_ref[...]
    Hp = gi.shape[-1] // 3                            # lane-aligned gate width

    r = jax.nn.sigmoid(gi[:, 0:Hp] + gh[:, 0:Hp])
    z = jax.nn.sigmoid(gi[:, Hp:2 * Hp] + gh[:, Hp:2 * Hp])
    n = jnp.tanh(gi[:, 2 * Hp:3 * Hp] + r * gh[:, 2 * Hp:3 * Hp])
    h_new = (1.0 - z[:, :H]) * n[:, :H] + z[:, :H] * h

    hnew_ref[...] = h_new
    d_x = x.shape[-1]
    act_ref[:, :d_x] = x.astype(jnp.bfloat16)         # [emb, ctx]
    act_ref[:, d_x:] = h_new.astype(jnp.bfloat16)     # h_new


# --------------------------------------------------------------------------
# Kernel 2: vocab-tiled output projection, single fused bf16 weight stream.
#   pred_tile = act @ W[:, tile] + b[tile]        (f32 accumulation)
# --------------------------------------------------------------------------
def projection_kernel(act_ref, w_ref, b_ref, pred_ref):
    pred_ref[...] = (jnp.dot(act_ref[...], w_ref[...],
                             preferred_element_type=jnp.float32)
                     + b_ref[...])


# --------------------------------------------------------------------------
# Parameter init (PyTorch-shaped) + one-time kernel-layout preparation.
# --------------------------------------------------------------------------
def init_decoder_params(key, vocab_size, embedding_dim, hidden_size):
    ks = jax.random.split(key, 7)
    H, E, V = hidden_size, embedding_dim, vocab_size
    scale = 0.1
    return {
        "embedding": scale * jax.random.normal(ks[0], (V, E), jnp.float32),
        "w_ih":      scale * jax.random.normal(ks[1], (3 * H, E + H), jnp.float32),
        "w_hh":      scale * jax.random.normal(ks[2], (3 * H, H), jnp.float32),
        "b_ih":      scale * jax.random.normal(ks[3], (3 * H,), jnp.float32),
        "b_hh":      scale * jax.random.normal(ks[4], (3 * H,), jnp.float32),
        "lin_w":     scale * jax.random.normal(ks[5], (V, E + 2 * H), jnp.float32),
        "lin_b":     scale * jax.random.normal(ks[6], (V,), jnp.float32),
    }


def prepare_decoder_params(raw, embedding_dim, hidden_size, tile_n=2048):
    """One-time re-layout: transpose / fuse / pad / bf16-cast OUTSIDE the hot path."""
    E, H = embedding_dim, hidden_size
    V = raw["embedding"].shape[0]
    Hp = _round_up(H, 128)                      # lane-aligned gate block width

    # ---- GRU gate weights: transpose + pad each gate block to Hp ---------
    def gate_layout(w):                         # w: (3H, K)   gates r, z, n
        K = w.shape[1]
        w3 = w.reshape(3, H, K)                 # (3, H, K)
        w3 = jnp.transpose(w3, (2, 0, 1))       # (K, 3, H)
        w3 = jnp.pad(w3, ((0, 0), (0, 0), (0, Hp - H)))
        return w3.reshape(K, 3 * Hp)            # (K, 3*Hp)

    def gate_bias(b):
        b3 = jnp.pad(b.reshape(3, H), ((0, 0), (0, Hp - H)))
        return b3.reshape(1, 3 * Hp)

    # ---- fused projection weight, activation order [emb, ctx, h_new] -----
    v128 = _round_up(V, 128)
    tn = min(_round_up(tile_n, 128), v128)      # lane-dense vocab tile
    v_pad = _round_up(v128, tn)
    pad = v_pad - V

    lin_w, lin_b = raw["lin_w"], raw["lin_b"]
    w_proj = jnp.concatenate(
        [lin_w[:, 0:E],                         # embedded block
         lin_w[:, E + H:E + 2 * H],             # context  block
         lin_w[:, E:E + H]],                    # hidden   block
        axis=1).T                               # (E+2H, V)
    b_proj = lin_b
    if pad:
        w_proj = jnp.pad(w_proj, ((0, 0), (0, pad)))
        b_proj = jnp.pad(b_proj, (0, pad))

    return {
        "embedding": raw["embedding"],                          # (V, E) f32
        "wi": gate_layout(raw["w_ih"]).astype(jnp.bfloat16),    # (E+H, 3Hp)
        "wh": gate_layout(raw["w_hh"]).astype(jnp.bfloat16),    # (H,   3Hp)
        "bi": gate_bias(raw["b_ih"]).astype(jnp.float32),       # (1, 3Hp)
        "bh": gate_bias(raw["b_hh"]).astype(jnp.float32),       # (1, 3Hp)
        "w_proj": w_proj.astype(jnp.bfloat16),                  # (E+2H, V_pad) streamed
        "b_proj": b_proj.reshape(1, v_pad).astype(jnp.float32), # (1, V_pad)
        "vocab_size": V,
        "tile_n": tn,
    }


# --------------------------------------------------------------------------
# Forward pass.
# --------------------------------------------------------------------------
def decoder_forward(prep, input_ids, hidden, context, hidden_size, embedding_dim):
    """Returns (prediction (B, V) f32, hidden (1, B, H) f32)."""
    H, E = hidden_size, embedding_dim
    B = input_ids.shape[0]
    V = prep["vocab_size"]
    v_pad = prep["b_proj"].shape[1]
    tn = prep["tile_n"]
    K = E + 2 * H
    Bp = _round_up(max(B, 16), 16)    # 16 rows per bf16 sublane group

    # plain-JAX glue: embedding gather + squeeze + concat + batch pad.
    # TODO(synk): fold the embedding gather / concat into the GRU kernel via
    # scalar-prefetch + manual DMA gather; training-mode dropout not implemented
    # (eval => identity).
    emb = prep["embedding"][input_ids]                 # (B, E)
    ctx = context[0]                                   # (B, H)
    h0 = hidden[0]                                     # (B, H)
    x = jnp.concatenate([emb, ctx], axis=1)            # (B, E+H)
    if Bp != B:
        x = jnp.pad(x, ((0, Bp - B), (0, 0)))
        h0 = jnp.pad(h0, ((0, Bp - B), (0, 0)))

    vmem = pl.BlockSpec(memory_space=pltpu.MemorySpace.VMEM)

    # ---- GRU step: computed exactly once, fully resident ------------------
    h_new, act = pl.pallas_call(
        gru_step_kernel,
        out_shape=(jax.ShapeDtypeStruct((Bp, H), jnp.float32),
                   jax.ShapeDtypeStruct((Bp, K), jnp.bfloat16)),
        in_specs=[vmem] * 6,
        out_specs=(vmem, vmem),
    )(x, h0, prep["wi"], prep["wh"], prep["bi"], prep["bh"])

    # ---- vocab-tiled projection: single fused bf16 weight stream ----------
    grid = (v_pad // tn,)
    pred = pl.pallas_call(
        projection_kernel,
        out_shape=jax.ShapeDtypeStruct((Bp, v_pad), jnp.float32),
        grid_spec=pltpu.PrefetchScalarGridSpec(
            num_scalar_prefetch=0,
            grid=grid,
            in_specs=[
                pl.BlockSpec((Bp, K), lambda j: (0, 0)),    # act: resident bf16
                pl.BlockSpec((K, tn), lambda j: (0, j)),    # fused weight tile
                pl.BlockSpec((1, tn), lambda j: (0, j)),    # bias tile
            ],
            out_specs=pl.BlockSpec((Bp, tn), lambda j: (0, j)),
        ),
        compiler_params=pltpu.CompilerParams(
            dimension_semantics=("parallel",),
            vmem_limit_bytes=_vmem_limit_bytes()),
    )(act, prep["w_proj"], prep["b_proj"])

    return pred[:B, :V], h_new[:B][None, :, :]


# --------------------------------------------------------------------------
# Pure-JAX reference (mirrors the PyTorch math) for correctness checking.
# --------------------------------------------------------------------------
def decoder_forward_ref(raw, input_ids, hidden, context, hidden_size, embedding_dim):
    H, E = hidden_size, embedding_dim
    emb = raw["embedding"][input_ids]
    ctx = context[0]
    h = hidden[0]
    x = jnp.concatenate([emb, ctx], axis=1)
    gi = x @ raw["w_ih"].T + raw["b_ih"]
    gh = h @ raw["w_hh"].T + raw["b_hh"]
    r = jax.nn.sigmoid(gi[:, 0:H] + gh[:, 0:H])
    z = jax.nn.sigmoid(gi[:, H:2 * H] + gh[:, H:2 * H])
    n = jnp.tanh(gi[:, 2 * H:] + r * gh[:, 2 * H:])
    h_new = (1.0 - z) * n + z * h
    out = jnp.concatenate([emb, h_new, ctx], axis=1)
    pred = out @ raw["lin_w"].T + raw["lin_b"]
    return pred, h_new[None, :, :]


if __name__ == "__main__":
    vocab_size, embedding_dim, hidden_size = 128, 32, 32
    batch = 2

    key = jax.random.PRNGKey(0)
    kp, ki, kh, kc = jax.random.split(key, 4)
    raw_params = init_decoder_params(kp, vocab_size, embedding_dim, hidden_size)
    prep_params = prepare_decoder_params(raw_params, embedding_dim, hidden_size,
                                         tile_n=2048)

    input_ids = jax.random.randint(ki, (batch,), 0, vocab_size, dtype=jnp.int32)
    hidden = jax.random.normal(kh, (1, batch, hidden_size), jnp.float32)
    context = jax.random.normal(kc, (1, batch, hidden_size), jnp.float32)

    pred, h_new = decoder_forward(prep_params, input_ids, hidden, context,
                                  hidden_size, embedding_dim)
    jax.block_until_ready((pred, h_new))

    pred_ref, h_ref = decoder_forward_ref(raw_params, input_ids, hidden, context,
                                          hidden_size, embedding_dim)

    assert pred.shape == (batch, vocab_size)
    assert h_new.shape == (1, batch, hidden_size)
    # GRU weights are bf16 on the MXU (f32 accumulation / f32 gate math)
    assert jnp.allclose(h_new, h_ref, atol=2e-2, rtol=2e-2)
    # projection: bf16 activations + bf16 streamed weights, f32 accumulation
    assert jnp.allclose(pred, pred_ref, atol=5e-2, rtol=5e-2)

    print("KERNEL_OK")
</pallas_src>

<mosaic_0001>
module attributes {stable_mosaic.version = 11 : i64} {
  func.func @gru_step_kernel(%arg0: memref<16x64xf32, #tpu.memory_space<vmem>>, %arg1: memref<16x32xf32, #tpu.memory_space<vmem>>, %arg2: memref<64x384xbf16, #tpu.memory_space<vmem>>, %arg3: memref<32x384xbf16, #tpu.memory_space<vmem>>, %arg4: memref<1x384xf32, #tpu.memory_space<vmem>>, %arg5: memref<1x384xf32, #tpu.memory_space<vmem>>, %arg6: memref<16x32xf32, #tpu.memory_space<vmem>>, %arg7: memref<16x96xbf16, #tpu.memory_space<vmem>>) attributes {dimension_semantics = [], scalar_prefetch = 0 : i64, scratch_operands = 0 : i64, tpu.core_type = #tpu.core_type<tc>} {
    %c0 = arith.constant 0 : index
    %c0_0 = arith.constant 0 : index
    %0 = vector.load %arg0[%c0, %c0_0] : memref<16x64xf32, #tpu.memory_space<vmem>>, vector<16x64xf32>
    %c0_1 = arith.constant 0 : index
    %c0_2 = arith.constant 0 : index
    %1 = vector.load %arg1[%c0_1, %c0_2] : memref<16x32xf32, #tpu.memory_space<vmem>>, vector<16x32xf32>
    %2 = arith.truncf %0 : vector<16x64xf32> to vector<16x64xbf16>
    %c0_3 = arith.constant 0 : index
    %c0_4 = arith.constant 0 : index
    %3 = vector.load %arg2[%c0_3, %c0_4] : memref<64x384xbf16, #tpu.memory_space<vmem>>, vector<64x384xbf16>
    %cst = arith.constant dense<0.000000e+00> : vector<16x384xf32>
    %4 = tpu.matmul %2, %3, %cst {dimension_numbers = #tpu.dot_dimension_numbers<[1], [0], [0], [1], [0, 0, 1, 1], [], []>} : vector<16x64xbf16>, vector<64x384xbf16>, vector<16x384xf32> -> vector<16x384xf32>
    %c0_5 = arith.constant 0 : index
    %c0_6 = arith.constant 0 : index
    %5 = vector.load %arg4[%c0_5, %c0_6] : memref<1x384xf32, #tpu.memory_space<vmem>>, vector<1x384xf32>
    %6 = vector.broadcast %5 : vector<1x384xf32> to vector<16x384xf32>
    %7 = arith.addf %4, %6 : vector<16x384xf32>
    %8 = arith.truncf %1 : vector<16x32xf32> to vector<16x32xbf16>
    %c0_7 = arith.constant 0 : index
    %c0_8 = arith.constant 0 : index
    %9 = vector.load %arg3[%c0_7, %c0_8] : memref<32x384xbf16, #tpu.memory_space<vmem>>, vector<32x384xbf16>
    %cst_9 = arith.constant dense<0.000000e+00> : vector<16x384xf32>
    %10 = tpu.matmul %8, %9, %cst_9 {dimension_numbers = #tpu.dot_dimension_numbers<[1], [0], [0], [1], [0, 0, 1, 1], [], []>} : vector<16x32xbf16>, vector<32x384xbf16>, vector<16x384xf32> -> vector<16x384xf32>
    %c0_10 = arith.constant 0 : index
    %c0_11 = arith.constant 0 : index
    %11 = vector.load %arg5[%c0_10, %c0_11] : memref<1x384xf32, #tpu.memory_space<vmem>>, vector<1x384xf32>
    %12 = vector.broadcast %11 : vector<1x384xf32> to vector<16x384xf32>
    %13 = arith.addf %10, %12 : vector<16x384xf32>
    %14 = vector.extract_strided_slice %7 {offsets = [0, 0], sizes = [16, 128], strides = [1, 1]} : vector<16x384xf32> to vector<16x128xf32>
    %15 = vector.extract_strided_slice %13 {offsets = [0, 0], sizes = [16, 128], strides = [1, 1]} : vector<16x384xf32> to vector<16x128xf32>
    %16 = arith.addf %14, %15 : vector<16x128xf32>
    %17 = arith.negf %16 : vector<16x128xf32>
    %18 = math.exp %17 : vector<16x128xf32>
    %cst_12 = arith.constant 1.000000e+00 : f32
    %19 = vector.broadcast %cst_12 : f32 to vector<16x128xf32>
    %20 = arith.addf %19, %18 : vector<16x128xf32>
    %21 = arith.divf %19, %20 : vector<16x128xf32>
    %22 = vector.extract_strided_slice %7 {offsets = [0, 128], sizes = [16, 128], strides = [1, 1]} : vector<16x384xf32> to vector<16x128xf32>
    %23 = vector.extract_strided_slice %13 {offsets = [0, 128], sizes = [16, 128], strides = [1, 1]} : vector<16x384xf32> to vector<16x128xf32>
    %24 = arith.addf %22, %23 : vector<16x128xf32>
    %25 = arith.negf %24 : vector<16x128xf32>
    %26 = math.exp %25 : vector<16x128xf32>
    %cst_13 = arith.constant 1.000000e+00 : f32
    %27 = vector.broadcast %cst_13 : f32 to vector<16x128xf32>
    %28 = arith.addf %27, %26 : vector<16x128xf32>
    %29 = arith.divf %27, %28 : vector<16x128xf32>
    %30 = vector.extract_strided_slice %7 {offsets = [0, 256], sizes = [16, 128], strides = [1, 1]} : vector<16x384xf32> to vector<16x128xf32>
    %31 = vector.extract_strided_slice %13 {offsets = [0, 256], sizes = [16, 128], strides = [1, 1]} : vector<16x384xf32> to vector<16x128xf32>
    %32 = arith.mulf %21, %31 : vector<16x128xf32>
    %33 = arith.addf %30, %32 : vector<16x128xf32>
    %34 = math.tanh %33 : vector<16x128xf32>
    %35 = vector.extract_strided_slice %29 {offsets = [0, 0], sizes = [16, 32], strides = [1, 1]} : vector<16x128xf32> to vector<16x32xf32>
    %cst_14 = arith.constant 1.000000e+00 : f32
    %36 = vector.broadcast %cst_14 : f32 to vector<16x32xf32>
    %37 = arith.subf %36, %35 : vector<16x32xf32>
    %38 = vector.extract_strided_slice %34 {offsets = [0, 0], sizes = [16, 32], strides = [1, 1]} : vector<16x128xf32> to vector<16x32xf32>
    %39 = arith.mulf %37, %38 : vector<16x32xf32>
    %40 = vector.extract_strided_slice %29 {offsets = [0, 0], sizes = [16, 32], strides = [1, 1]} : vector<16x128xf32> to vector<16x32xf32>
    %41 = arith.mulf %40, %1 : vector<16x32xf32>
    %42 = arith.addf %39, %41 : vector<16x32xf32>
    %c0_15 = arith.constant 0 : index
    %c0_16 = arith.constant 0 : index
    %43 = vector.load %arg6[%c0_15, %c0_16] : memref<16x32xf32, #tpu.memory_space<vmem>>, vector<16x32xf32>
    tpu.vector_store %arg6[%c0_15, %c0_16], %42 {strides = array<i32>} : memref<16x32xf32, #tpu.memory_space<vmem>>, vector<16x32xf32>,
    %44 = arith.truncf %0 : vector<16x64xf32> to vector<16x64xbf16>
    %c0_17 = arith.constant 0 : index
    %c0_18 = arith.constant 0 : index
    %45 = vector.load %arg7[%c0_17, %c0_18] : memref<16x96xbf16, #tpu.memory_space<vmem>>, vector<16x64xbf16>
    tpu.vector_store %arg7[%c0_17, %c0_18], %44 {strides = array<i32>} : memref<16x96xbf16, #tpu.memory_space<vmem>>, vector<16x64xbf16>,
    %46 = arith.truncf %42 : vector<16x32xf32> to vector<16x32xbf16>
    %c0_19 = arith.constant 0 : index
    %c64 = arith.constant 64 : index
    %47 = vector.load %arg7[%c0_19, %c64] : memref<16x96xbf16, #tpu.memory_space<vmem>>, vector<16x32xbf16>
    tpu.vector_store %arg7[%c0_19, %c64], %46 {strides = array<i32>} : memref<16x96xbf16, #tpu.memory_space<vmem>>, vector<16x32xbf16>,
    return
  }
}

</mosaic_0001>

<llo_original>
// kernel: tpu_custom_call.1
$region0: #{tpu_custom_call.1}
  #allocation0 [shape = 'u32[]', space=smem, size = 0x4, offset = 0x4, fixed_abs, tag = 'smem constant byte address 0x4 - core index']
  #allocation1 [shape = 'u32[72,128]{1,0:T(1,128)}', space=vmem, size = 0x9000, scoped, tag = 'internal scratch']
  %s0 = inlined_call_operand.hbm [shape: f32[16,64], index: 0, kind: input, shape index: {}]
  %s1 = inlined_call_operand.hbm [shape: f32[16,32], index: 1, kind: input, shape index: {}]
  %s2 = inlined_call_operand.hbm [shape: bf16[64,384], index: 2, kind: input, shape index: {}]
  %s3 = inlined_call_operand.hbm [shape: bf16[32,384], index: 3, kind: input, shape index: {}]
  %s4 = inlined_call_operand.vmem [shape: f32[1,384], index: 4, kind: input, shape index: {}]
  %s5 = inlined_call_operand.hbm [shape: f32[1,384], index: 5, kind: input, shape index: {}]
  %s6 = inlined_call_operand.hbm [shape: f32[16,32], index: 6, kind: output, shape index: {0}]
  %s7 = inlined_call_operand.hbm [shape: bf16[16,96], index: 7, kind: output, shape index: {1}]
  %8 = xla_tuple %s6, %s7
  %s9 = sld [smem:[#allocation0]]
  $region62: #{tpu_custom_call.1} parent=0
    _
  %s11 = ssub.s32 1, %s9
  %s12 = scalar_select 0, %s11, %s9
  $region1: #{tpu_custom_call.1} parent=0
    #allocation2 [shape = 'u8[8192]{0}', space=vmem, size = 0x2000, scoped, tag = 'input window, operand 0, single buffered']
    #allocation3 [shape = 's32[1]{0}', space=sflag, size = 0x4, scoped, tag = 'scoped memory for tpu_custom_call.1']
    #allocation4 [shape = 's32[1]{0}', space=sflag, size = 0x4, scoped, tag = 'scoped memory for tpu_custom_call.1']
    #allocation5 [shape = 'u8[8192]{0}', space=vmem, size = 0x2000, scoped, tag = 'input window, operand 1, single buffered']
    #allocation6 [shape = 's32[1]{0}', space=sflag, size = 0x4, scoped, tag = 'scoped memory for tpu_custom_call.1']
    #allocation7 [shape = 'u8[49152]{0}', space=vmem, size = 0xc000, scoped, tag = 'input window, operand 2, single buffered']
    #allocation8 [shape = 'u8[24576]{0}', space=vmem, size = 0x6000, scoped, tag = 'input window, operand 3, single buffered']
    #allocation9 [shape = 's32[1]{0}', space=sflag, size = 0x4, scoped, tag = 'scoped memory for tpu_custom_call.1']
    #allocation10 [shape = 'u8[1536]{0}', space=vmem, size = 0x800, scoped, tag = 'input window, operand 5, single buffered']
    #allocation11 [shape = 'u8[8192]{0}', space=vmem, size = 0x2000, scoped, tag = 'output window, operand 0, single buffered']
    #allocation12 [shape = 'u8[4096]{0}', space=vmem, size = 0x1000, scoped, tag = 'output window, operand 1, single buffered']
    #allocation13 [shape = 's32[1]{0}', space=sflag, size = 0x4, scoped, tag = 'scoped memory for tpu_custom_call.1']
    %13 = vsyncpa [#allocation3], 0
    %14 = vsyncpa [#allocation6], 0
    %15 = vsyncpa [#allocation9], 0
    %16 = vsyncpa [#allocation4], 0
    %17 = vsyncpa [#allocation13], 0
    // Predicated region
    $region2: #{tpu_custom_call.1} parent=1 // pred_check
      _
    $region3: #{tpu_custom_call.1} parent=1 // pred_check_branch
      %19 = sbr.rel (0) target = $region5
    $region4: #{tpu_custom_call.1} parent=1 // pred_region
      %21 = vsyncadd [#allocation3], 0
      %s22 = sshll.u32 %s0, 4
      %s23 = int_to_ptr.hbm [resolvable:$true] %s22
      %s24 = sshll.u32 [#allocation2], 4
      %s25 = int_to_ptr.vmem [resolvable:$true] %s24
      %30 = dma.hbm_to_vmem [thread:$0]  %s23, 256, %s25, [#allocation3], 128, 128, 8
    $region5: #{tpu_custom_call.1} parent=1 // pred_fallthru
      _
    // Predicated region
    $region6: #{tpu_custom_call.1} parent=1 // pred_check
      _
    $region7: #{tpu_custom_call.1} parent=1 // pred_check_branch
      %32 = sbr.rel (0) target = $region9
    $region8: #{tpu_custom_call.1} parent=1 // pred_region
      %34 = vsyncadd [#allocation6], 0
      %s35 = sshll.u32 %s1, 4
      %s36 = int_to_ptr.hbm [resolvable:$true] %s35
      %s37 = sshll.u32 [#allocation5], 4
      %s38 = int_to_ptr.vmem [resolvable:$true] %s37
      %43 = dma.hbm_to_vmem [thread:$0]  %s36, 256, %s38, [#allocation6], 128, 128, 8
    $region9: #{tpu_custom_call.1} parent=1 // pred_fallthru
      _
    // Predicated region
    $region10: #{tpu_custom_call.1} parent=1 // pred_check
      _
    $region11: #{tpu_custom_call.1} parent=1 // pred_check_branch
      %45 = sbr.rel (0) target = $region13
    $region12: #{tpu_custom_call.1} parent=1 // pred_region
      %47 = vsyncadd [#allocation6], 0
      %s48 = sshll.u32 %s2, 4
      %s49 = int_to_ptr.hbm [resolvable:$true] %s48
      %s50 = sshll.u32 [#allocation7], 4
      %s51 = int_to_ptr.vmem [resolvable:$true] %s50
      %56 = dma.hbm_to_vmem [thread:$0]  %s49, 1536, %s51, [#allocation6], 192, 192, 12
    $region13: #{tpu_custom_call.1} parent=1 // pred_fallthru
      _
    // Predicated region
    $region14: #{tpu_custom_call.1} parent=1 // pred_check
      _
    $region15: #{tpu_custom_call.1} parent=1 // pred_check_branch
      %58 = sbr.rel (0) target = $region17
    $region16: #{tpu_custom_call.1} parent=1 // pred_region
      %60 = vsyncadd [#allocation9], 0
      %s61 = sshll.u32 %s3, 4
      %s62 = int_to_ptr.hbm [resolvable:$true] %s61
      %s63 = sshll.u32 [#allocation8], 4
      %s64 = int_to_ptr.vmem [resolvable:$true] %s63
      %69 = dma.hbm_to_vmem [thread:$0]  %s62, 768, %s64, [#allocation9], 192, 192, 12
    $region17: #{tpu_custom_call.1} parent=1 // pred_fallthru
      _
    // Predicated region
    $region18: #{tpu_custom_call.1} parent=1 // pred_check
      _
    $region19: #{tpu_custom_call.1} parent=1 // pred_check_branch
      %71 = sbr.rel (0) target = $region21
    $region20: #{tpu_custom_call.1} parent=1 // pred_region
      _
    $region21: #{tpu_custom_call.1} parent=1 // pred_fallthru
      _
    // Predicated region
    $region22: #{tpu_custom_call.1} parent=1 // pred_check
      _
    $region23: #{tpu_custom_call.1} parent=1 // pred_check_branch
      %73 = sbr.rel (0) target = $region25
    $region24: #{tpu_custom_call.1} parent=1 // pred_region
      %75 = vsyncadd [#allocation9], 0
      %s77 = sshll.u32 %s5, 4
      %s78 = int_to_ptr.hbm [resolvable:$true] %s77
      %s79 = sshll.u32 [#allocation10], 4
      %s80 = int_to_ptr.vmem [resolvable:$true] %s79
      %82 = dma.hbm_to_vmem [thread:$0]  %s78, 48, %s80, [#allocation9]
    $region25: #{tpu_custom_call.1} parent=1 // pred_fallthru
      _
    // Predicated region
    $region26: #{tpu_custom_call.1} parent=1 // pred_check
      _
    $region27: #{tpu_custom_call.1} parent=1 // pred_check_branch
      %84 = sbr.rel (0) target = $region29
    $region28: #{tpu_custom_call.1} parent=1 // pred_region
      %86 = dma.done [#allocation3], 256
    $region29: #{tpu_custom_call.1} parent=1 // pred_fallthru
      _
    // Predicated region
    $region30: #{tpu_custom_call.1} parent=1 // pred_check
      _
    $region31: #{tpu_custom_call.1} parent=1 // pred_check_branch
      %88 = sbr.rel (0) target = $region33
    $region32: #{tpu_custom_call.1} parent=1 // pred_region
      %90 = dma.done [#allocation6], 256
    $region33: #{tpu_custom_call.1} parent=1 // pred_fallthru
      _
    // Predicated region
    $region34: #{tpu_custom_call.1} parent=1 // pred_check
      _
    $region35: #{tpu_custom_call.1} parent=1 // pred_check_branch
      %92 = sbr.rel (0) target = $region37
    $region36: #{tpu_custom_call.1} parent=1 // pred_region
      %94 = dma.done [#allocation6], 1536
    $region37: #{tpu_custom_call.1} parent=1 // pred_fallthru
      _
    // Predicated region
    $region38: #{tpu_custom_call.1} parent=1 // pred_check
      _
    $region39: #{tpu_custom_call.1} parent=1 // pred_check_branch
      %96 = sbr.rel (0) target = $region41
    $region40: #{tpu_custom_call.1} parent=1 // pred_region
      %98 = dma.done [#allocation9], 768
    $region41: #{tpu_custom_call.1} parent=1 // pred_fallthru
      _
    // Predicated region
    $region42: #{tpu_custom_call.1} parent=1 // pred_check
      _
    $region43: #{tpu_custom_call.1} parent=1 // pred_check_branch
      %100 = sbr.rel (0) target = $region45
    $region44: #{tpu_custom_call.1} parent=1 // pred_region
      %102 = dma.done [#allocation9], 48
    $region45: #{tpu_custom_call.1} parent=1 // pred_fallthru
      _
    %v104 = vld [vmem:[#allocation2] sm:$0xff]
    %v105 = vld [vmem:[#allocation2 + $0x8] sm:$0xff]
    %v106 = vld [vmem:[#allocation5] sm:$0xff]
    %v107 = vld [vmem:[#allocation5 + $0x8] sm:$0xff]
    %v108 = vpack.c.bf16 %v104, %v104
    %v109 = vpack.c.bf16 %v105, %v105
    %v110 = vld [vmem:[#allocation7] sm:$0xff]
    %v111 = vld [vmem:[#allocation7 + $0x8] sm:$0xf]
    %v112 = vld [vmem:[#allocation7 + $0xc] sm:$0xff]
    %v113 = vld [vmem:[#allocation7 + $0x14] sm:$0xf]
    %v114 = vld [vmem:[#allocation7 + $0x18] sm:$0xff]
    %v115 = vld [vmem:[#allocation7 + $0x20] sm:$0xf]
    %v116 = vld [vmem:[#allocation7 + $0x24] sm:$0xff]
    %v117 = vld [vmem:[#allocation7 + $0x2c] sm:$0xf]
    %v118 = vld [vmem:[#allocation7 + $0x30] sm:$0xff]
    %v119 = vld [vmem:[#allocation7 + $0x38] sm:$0xf]
    %v120 = vld [vmem:[#allocation7 + $0x3c] sm:$0xff]
    %v121 = vld [vmem:[#allocation7 + $0x44] sm:$0xf]
    %v122 = vld [vmem:[#allocation7 + $0x48] sm:$0xff]
    %v123 = vld [vmem:[#allocation7 + $0x50] sm:$0xf]
    %v124 = vld [vmem:[#allocation7 + $0x54] sm:$0xff]
    %v125 = vld [vmem:[#allocation7 + $0x5c] sm:$0xf]
    %v126 = vld [vmem:[%s4] sm:$0x7]
    %v128 = vperm.slane %v126, 0
    %v129 = vperm.slane %v126, 1
    %v130 = vperm.slane %v126, 2
    %v136 = vunpack.c.l.b16 %v108
    %v137 = vunpack.c.l.b16 %v109
    %v138 = vpack.c.b16 %v137, %v136
    %v155 = vunpack.c.l.b16 %v110
    %v156 = vunpack.c.h.b16 %v110
    %v157 = vunpack.c.l.b16 %v111
    %v158 = vunpack.c.l.b16 %v112
    %v159 = vunpack.c.h.b16 %v112
    %v160 = vunpack.c.l.b16 %v113
    %v161 = vunpack.c.l.b16 %v114
    %v162 = vunpack.c.h.b16 %v114
    %v163 = vunpack.c.l.b16 %v115
    %v164 = vunpack.c.l.b16 %v116
    %v165 = vunpack.c.h.b16 %v116
    %v166 = vunpack.c.l.b16 %v117
    %v167 = vunpack.c.l.b16 %v118
    %v168 = vunpack.c.h.b16 %v118
    %v169 = vunpack.c.l.b16 %v119
    %v170 = vunpack.c.l.b16 %v120
    %v171 = vunpack.c.h.b16 %v120
    %v172 = vunpack.c.l.b16 %v121
    %v173 = vunpack.c.l.b16 %v122
    %v174 = vunpack.c.h.b16 %v122
    %v175 = vunpack.c.l.b16 %v123
    %v176 = vunpack.c.l.b16 %v124
    %v177 = vunpack.c.h.b16 %v124
    %v178 = vunpack.c.l.b16 %v125
    %v179 = vpack.c.b16 %v158, %v155
    %v180 = vpack.c.b16 %v159, %v156
    %v181 = vpack.c.b16 %v160, %v157
    %v182 = vpack.c.b16 %v164, %v161
    %v183 = vpack.c.b16 %v165, %v162
    %v184 = vpack.c.b16 %v166, %v163
    %v185 = vpack.c.b16 %v170, %v167
    %v186 = vpack.c.b16 %v171, %v168
    %v187 = vpack.c.b16 %v172, %v169
    %v188 = vpack.c.b16 %v176, %v173
    %v189 = vpack.c.b16 %v177, %v174
    %v190 = vpack.c.b16 %v178, %v175
    %vm203 = vcmask 523264
    %v205 = vsel %vm203, %v138, 0
    %207 = vmatpush.bf16.msra.mxu0 0
    %208 = vmatpush.bf16.msra.mxu0 0
    %209 = vmatpush.bf16.msra.mxu0 0
    %210 = vmatpush.bf16.msra.mxu0 0
    %211 = vmatpush.bf16.msra.mxu0 %v188
    %212 = vmatpush.bf16.msra.mxu0 %v185
    %213 = vmatpush.bf16.msra.mxu0 %v182
    %214 = vmatpush.bf16.msra.mxu0 %v179
    %215 = vmatmul.bf16.gmra.mxu0 %v205
    %v216 = vpop.f32.mrf.mxu0
    %v217 = vadd.f32 %v128, %v216
    %v218 = vpop.f32.mrf.mxu0
    %v219 = vadd.f32 %v128, %v218
    %220 = vdwg.mxu0
    %221 = vmatpush.bf16.msra.mxu0 0
    %222 = vmatpush.bf16.msra.mxu0 0
    %223 = vmatpush.bf16.msra.mxu0 0
    %224 = vmatpush.bf16.msra.mxu0 0
    %225 = vmatpush.bf16.msra.mxu0 %v189
    %226 = vmatpush.bf16.msra.mxu0 %v186
    %227 = vmatpush.bf16.msra.mxu0 %v183
    %228 = vmatpush.bf16.msra.mxu0 %v180
    %229 = vmatmul.bf16.gmra.mxu0 %v205
    %v230 = vpop.f32.mrf.mxu0
    %v231 = vadd.f32 %v129, %v230
    %v232 = vpop.f32.mrf.mxu0
    %v233 = vadd.f32 %v129, %v232
    %234 = vdwg.mxu0
    %235 = vmatpush.bf16.msra.mxu0 0
    %236 = vmatpush.bf16.msra.mxu0 0
    %237 = vmatpush.bf16.msra.mxu0 0
    %238 = vmatpush.bf16.msra.mxu0 0
    %239 = vmatpush.bf16.msra.mxu0 %v190
    %240 = vmatpush.bf16.msra.mxu0 %v187
    %241 = vmatpush.bf16.msra.mxu0 %v184
    %242 = vmatpush.bf16.msra.mxu0 %v181
    %243 = vmatmul.bf16.gmra.mxu0 %v205
    %v244 = vpop.f32.mrf.mxu0
    %v245 = vadd.f32 %v130, %v244
    %v246 = vpop.f32.mrf.mxu0
    %v247 = vadd.f32 %v130, %v246
    %248 = vdwg.mxu0
    %v249 = vpack.c.bf16 %v107, %v106
    %v250 = vld [vmem:[#allocation8] sm:$0xff]
    %v251 = vld [vmem:[#allocation8 + $0x8] sm:$0xf]
    %v252 = vld [vmem:[#allocation8 + $0xc] sm:$0xff]
    %v253 = vld [vmem:[#allocation8 + $0x14] sm:$0xf]
    %v254 = vld [vmem:[#allocation8 + $0x18] sm:$0xff]
    %v255 = vld [vmem:[#allocation8 + $0x20] sm:$0xf]
    %v256 = vld [vmem:[#allocation8 + $0x24] sm:$0xff]
    %v257 = vld [vmem:[#allocation8 + $0x2c] sm:$0xf]
    %v258 = vld [vmem:[#allocation10] sm:$0x7]
    %v260 = vperm.slane %v258, 0
    %v261 = vperm.slane %v258, 1
    %v262 = vperm.slane %v258, 2
    %v274 = vunpack.c.l.b16 %v250
    %v275 = vunpack.c.h.b16 %v250
    %v276 = vunpack.c.l.b16 %v251
    %v277 = vunpack.c.l.b16 %v252
    %v278 = vunpack.c.h.b16 %v252
    %v279 = vunpack.c.l.b16 %v253
    %v280 = vunpack.c.l.b16 %v254
    %v281 = vunpack.c.h.b16 %v254
    %v282 = vunpack.c.l.b16 %v255
    %v283 = vunpack.c.l.b16 %v256
    %v284 = vunpack.c.h.b16 %v256
    %v285 = vunpack.c.l.b16 %v257
    %v286 = vpack.c.b16 %v277, %v274
    %v287 = vpack.c.b16 %v278, %v275
    %v288 = vpack.c.b16 %v279, %v276
    %v289 = vpack.c.b16 %v283, %v280
    %v290 = vpack.c.b16 %v284, %v281
    %v291 = vpack.c.b16 %v285, %v282
    %vm298 = vcmask 261120
    %v300 = vsel %vm298, %v249, 0
    %302 = vmatpush.bf16.msra.mxu0 0
    %303 = vmatpush.bf16.msra.mxu0 0
    %304 = vmatpush.bf16.msra.mxu0 0
    %305 = vmatpush.bf16.msra.mxu0 0
    %306 = vmatpush.bf16.msra.mxu0 0
    %307 = vmatpush.bf16.msra.mxu0 0
    %308 = vmatpush.bf16.msra.mxu0 %v289
    %309 = vmatpush.bf16.msra.mxu0 %v286
    %310 = vmatmul.bf16.gmra.mxu0 %v300
    %v311 = vpop.f32.mrf.mxu0
    %v312 = vadd.f32 %v260, %v311
    %v313 = vpop.f32.mrf.mxu0
    %v314 = vadd.f32 %v260, %v313
    %315 = vdwg.mxu0
    %316 = vmatpush.bf16.msra.mxu0 0
    %317 = vmatpush.bf16.msra.mxu0 0
    %318 = vmatpush.bf16.msra.mxu0 0
    %319 = vmatpush.bf16.msra.mxu0 0
    %320 = vmatpush.bf16.msra.mxu0 0
    %321 = vmatpush.bf16.msra.mxu0 0
    %322 = vmatpush.bf16.msra.mxu0 %v290
    %323 = vmatpush.bf16.msra.mxu0 %v287
    %324 = vmatmul.bf16.gmra.mxu0 %v300
    %v325 = vpop.f32.mrf.mxu0
    %v326 = vadd.f32 %v261, %v325
    %v327 = vpop.f32.mrf.mxu0
    %v328 = vadd.f32 %v261, %v327
    %329 = vdwg.mxu0
    %330 = vmatpush.bf16.msra.mxu0 0
    %331 = vmatpush.bf16.msra.mxu0 0
    %332 = vmatpush.bf16.msra.mxu0 0
    %333 = vmatpush.bf16.msra.mxu0 0
    %334 = vmatpush.bf16.msra.mxu0 0
    %335 = vmatpush.bf16.msra.mxu0 0
    %336 = vmatpush.bf16.msra.mxu0 %v291
    %337 = vmatpush.bf16.msra.mxu0 %v288
    %338 = vmatmul.bf16.gmra.mxu0 %v300
    %v339 = vpop.f32.mrf.mxu0
    %v340 = vadd.f32 %v262, %v339
    %v341 = vpop.f32.mrf.mxu0
    %v342 = vadd.f32 %v262, %v341
    %343 = vdwg.mxu0
    %v344 = vadd.f32 %v217, %v312
    %v345 = vadd.f32 %v219, %v314
    %v346 = vxor.u32 %v344, 2147483648
    %v347 = vxor.u32 %v345, 2147483648
    %v348 = vmul.f32 %v346, 1.442695
    %v349 = vpow.pop %v348
    %v350 = vmul.f32 %v347, 1.442695
    %v351 = vpow.pop %v350
    %v352 = vadd.f32 %v349, 1.0
    %v353 = vadd.f32 %v351, 1.0
    %v354 = vrcp.pop %v352
    %v355 = vmul.f32 %v352, %v354
    %v356 = vsub.f32 1.0, %v355
    %v357 = vmul.f32 %v354, %v356
    %v358 = vadd.f32 %v354, %v357
    %vm359 = vweird.f32 %v352
    %vm360 = vweird.f32 %v354
    %vm361 = vmor %vm359, %vm360
    %v362 = vsel %vm361, %v354, %v358
    %v363 = vand.u32 2147483647, %v352
    %vm364 = vcmp.eq.f32.partialorder %v363, 8.507059e+37
    %v365 = vand.u32 %v352, 2147483648
    %v366 = vor.u32 1.1754944e-38, %v365
    %v367 = vsel %vm364, %v366, %v362
    %v368 = vmul.f32 1.0, %v367
    %v369 = vrcp.pop %v353
    %v370 = vmul.f32 %v353, %v369
    %v371 = vsub.f32 1.0, %v370
    %v372 = vmul.f32 %v369, %v371
    %v373 = vadd.f32 %v369, %v372
    %vm374 = vweird.f32 %v353
    %vm375 = vweird.f32 %v369
    %vm376 = vmor %vm374, %vm375
    %v377 = vsel %vm376, %v369, %v373
    %v378 = vand.u32 2147483647, %v353
    %vm379 = vcmp.eq.f32.partialorder %v378, 8.507059e+37
    %v380 = vand.u32 %v353, 2147483648
    %v381 = vor.u32 1.1754944e-38, %v380
    %v382 = vsel %vm379, %v381, %v377
    %v383 = vmul.f32 1.0, %v382
    %v384 = vadd.f32 %v231, %v326
    %v385 = vadd.f32 %v233, %v328
    %v386 = vxor.u32 %v384, 2147483648
    %v387 = vxor.u32 %v385, 2147483648
    %v388 = vmul.f32 %v386, 1.442695
    %v389 = vpow.pop %v388
    %v390 = vmul.f32 %v387, 1.442695
    %v391 = vpow.pop %v390
    %v392 = vadd.f32 %v389, 1.0
    %v393 = vadd.f32 %v391, 1.0
    %v394 = vrcp.pop %v392
    %v395 = vmul.f32 %v392, %v394
    %v396 = vsub.f32 1.0, %v395
    %v397 = vmul.f32 %v394, %v396
    %v398 = vadd.f32 %v394, %v397
    %vm399 = vweird.f32 %v392
    %vm400 = vweird.f32 %v394
    %vm401 = vmor %vm399, %vm400
    %v402 = vsel %vm401, %v394, %v398
    %v403 = vand.u32 2147483647, %v392
    %vm404 = vcmp.eq.f32.partialorder %v403, 8.507059e+37
    %v405 = vand.u32 %v392, 2147483648
    %v406 = vor.u32 1.1754944e-38, %v405
    %v407 = vsel %vm404, %v406, %v402
    %v408 = vmul.f32 1.0, %v407
    %v409 = vrcp.pop %v393
    %v410 = vmul.f32 %v393, %v409
    %v411 = vsub.f32 1.0, %v410
    %v412 = vmul.f32 %v409, %v411
    %v413 = vadd.f32 %v409, %v412
    %vm414 = vweird.f32 %v393
    %vm415 = vweird.f32 %v409
    %vm416 = vmor %vm414, %vm415
    %v417 = vsel %vm416, %v409, %v413
    %v418 = vand.u32 2147483647, %v393
    %vm419 = vcmp.eq.f32.partialorder %v418, 8.507059e+37
    %v420 = vand.u32 %v393, 2147483648
    %v421 = vor.u32 1.1754944e-38, %v420
    %v422 = vsel %vm419, %v421, %v417
    %v423 = vmul.f32 1.0, %v422
    %v424 = vmul.f32 %v368, %v340
    %v425 = vmul.f32 %v383, %v342
    %v426 = vadd.f32 %v245, %v424
    %v427 = vadd.f32 %v247, %v425
    %v428 = vtanh.pop %v426
    %v429 = vtanh.pop %v427
    %v430 = vsub.f32 1.0, %v408
    %v431 = vsub.f32 1.0, %v423
    %v432 = vmul.f32 %v430, %v428
    %v433 = vmul.f32 %v431, %v429
    %v434 = vmul.f32 %v408, %v106
    %v435 = vmul.f32 %v423, %v107
    %v436 = vadd.f32 %v432, %v434
    %v437 = vadd.f32 %v433, %v435
    %438 = vst.msk [vmem:[#allocation11] sm:$0xff] %vm298, %v436
    %439 = vst.msk [vmem:[#allocation11 + $0x8] sm:$0xff] %vm298, %v437
    %vm440 = vcmask 519168
    %441 = vst.msk [vmem:[#allocation12] sm:$0xf] %vm440, %v108
    %442 = vst.msk [vmem:[#allocation12 + $0x4] sm:$0xf] %vm440, %v109
    %v443 = vpack.c.bf16 %v436, %v436
    %v444 = vpack.c.bf16 %v437, %v437
    %447 = vrot.lane.b32.xlu0 %v443, 64
    %v448 = vpop.permute.xlu0 %447
    %449 = vrot.lane.b32.xlu0 %v444, 64
    %v450 = vpop.permute.xlu0 %449
    %vm453 = vcmask 781824
    %454 = vst.msk [vmem:[#allocation12] sm:$0xf] %vm453, %v448
    %455 = vst.msk [vmem:[#allocation12 + $0x4] sm:$0xf] %vm453, %v450
    // Predicated region
    $region46: #{tpu_custom_call.1} parent=1 // pred_check
      _
    $region47: #{tpu_custom_call.1} parent=1 // pred_check_branch
      %457 = sbr.rel (0) target = $region49
    $region48: #{tpu_custom_call.1} parent=1 // pred_region
      %459 = vsyncadd [#allocation4], 0
      %s460 = sshll.u32 [#allocation11], 4
      %s461 = int_to_ptr.vmem [resolvable:$true] %s460
      %s462 = sshll.u32 %s6, 4
      %s463 = int_to_ptr.hbm [resolvable:$true] %s462
      %468 = dma.vmem_to_hbm [thread:$0]  %s461, 256, %s463, [#allocation4], 128, 128, 8
    $region49: #{tpu_custom_call.1} parent=1 // pred_fallthru
      _
    // Predicated region
    $region50: #{tpu_custom_call.1} parent=1 // pred_check
      _
    $region51: #{tpu_custom_call.1} parent=1 // pred_check_branch
      %470 = sbr.rel (0) target = $region53
    $region52: #{tpu_custom_call.1} parent=1 // pred_region
      %472 = vsyncadd [#allocation13], 0
      %s473 = sshll.u32 [#allocation12], 4
      %s474 = int_to_ptr.vmem [resolvable:$true] %s473
      %s475 = sshll.u32 %s7, 4
      %s476 = int_to_ptr.hbm [resolvable:$true] %s475
      %481 = dma.vmem_to_hbm [thread:$0]  %s474, 128, %s476, [#allocation13], 64, 64, 4
    $region53: #{tpu_custom_call.1} parent=1 // pred_fallthru
      _
    // Predicated region
    $region54: #{tpu_custom_call.1} parent=1 // pred_check
      _
    $region55: #{tpu_custom_call.1} parent=1 // pred_check_branch
      %483 = sbr.rel (0) target = $region57
    $region56: #{tpu_custom_call.1} parent=1 // pred_region
      %485 = dma.done [#allocation4], 256
    $region57: #{tpu_custom_call.1} parent=1 // pred_fallthru
      _
    // Predicated region
    $region58: #{tpu_custom_call.1} parent=1 // pred_check
      _
    $region59: #{tpu_custom_call.1} parent=1 // pred_check_branch
      %487 = sbr.rel (0) target = $region61
    $region60: #{tpu_custom_call.1} parent=1 // pred_region
      %489 = dma.done [#allocation13], 128
    $region61: #{tpu_custom_call.1} parent=1 // pred_fallthru
      _
    %490 = vsyncpa [#allocation3], 1
    %491 = vsyncpa [#allocation6], 1
    %492 = vsyncpa [#allocation9], 1
    %493 = vsyncpa [#allocation4], 1
    %494 = vsyncpa [#allocation13], 1

</llo_original>
